<compile_context>
chip_gen: v7x
topology: tpu7x:2x2x1
jax: 0.10.0
libtpu: 0.0.40
codegen_flags: <defaults>
</compile_context>

<pallas_src>
import functools
import math

import jax
import jax.numpy as jnp
from jax.experimental import pallas as pl
from jax.experimental.pallas import tpu as pltpu

_VMEM_LIMIT_BYTES = 40 * 1024 * 1024        # conservative: fits v7x's 64 MiB VMEM
_TILE_VMEM_BUDGET = 24 * 1024 * 1024        # working-set target per grid step


def _round_up(a: int, b: int) -> int:
    return (a + b - 1) // b * b


def _pick_tile_nv(nv, t, pad, c_in, t_out, c_out_p, in_bytes, k,
                  budget_bytes=_TILE_VMEM_BUDGET):
    """Rows of (N*V) per grid step: double-buffered x/y tiles, the halo scratch,
    the in-kernel im2col slab (~K x the x tile) and the f32 accumulator must
    stay within the VMEM budget."""
    x_row = (t + 2 * pad) * c_in * in_bytes
    y_row_f32 = t_out * c_out_p * 4
    # 2 x bufs + 1 halo scratch + K im2col taps  |  2 y bufs (<=f32) + 1 f32 acc
    per_row = (3 + k) * x_row + 3 * y_row_f32
    tile = max(1, budget_bytes // max(per_row, 1))
    tile = min(nv, tile)
    if tile >= 8:
        tile = (tile // 8) * 8              # keep tile_nv * t_out sublane friendly
    return int(tile)


def conv_stats_kernel(x_ref, w_ref, y_ref, ps_ref, *scratch,
                      kernel_size, pad, stride, t_out):
    # x_ref:  (tile_nv, T, C_in)          input dtype (f32 or bf16)
    # w_ref:  (K*C_in, C_out_p)           im2col weight layout, input dtype
    # y_ref:  (tile_nv, T_out, C_out_p)   pre-BN conv output, input dtype
    # ps_ref: (1, 2, C_out_p)             per-tile [sum; sum-of-squares] (f32)
    # scratch[0] (pad>0 only): (tile_nv, T + 2*pad, C_in) temporal-halo buffer
    tile_nv, t_in, c_in = x_ref.shape
    c_out = w_ref.shape[1]

    if pad > 0:
        # Temporal 'same' padding built in VMEM (no HBM-side pad round trip).
        xp_ref = scratch[0]
        halo = jnp.zeros((tile_nv, pad, c_in), x_ref.dtype)
        xp_ref[:, :pad, :] = halo
        xp_ref[:, pad + t_in:, :] = halo
        xp_ref[:, pad:pad + t_in, :] = x_ref[...]
        src = xp_ref
    else:
        src = x_ref                        # K == 1: read x directly, no copy

    # im2col: stack the K temporal taps along the lane (channel) axis.
    taps = []
    for k in range(kernel_size):
        if stride == 1:
            taps.append(src[:, k:k + t_out, :])
        else:
            # one strided read per tap (pl.ds stride), not K value relayouts
            taps.append(src[:, pl.ds(k, t_out, stride), :])
    col = taps[0] if kernel_size == 1 else jnp.concatenate(taps, axis=-1)

    # One big 2-D MXU matmul with K*C_in contraction depth, f32 accumulation.
    acc = jnp.dot(col.reshape(tile_nv * t_out, kernel_size * c_in), w_ref[...],
                  preferred_element_type=jnp.float32)

    y_ref[...] = acc.reshape(tile_nv, t_out, c_out).astype(y_ref.dtype)

    # Per-channel sum / sum-of-squares partials from the f32 accumulator
    # (global training-mode BN stats are reduced across tiles in the wrapper).
    s = jnp.sum(acc, axis=0, keepdims=True)            # (1, C_out_p)
    ss = jnp.sum(acc * acc, axis=0, keepdims=True)     # (1, C_out_P)
    ps_ref[...] = jnp.concatenate([s, ss], axis=0).reshape(1, 2, c_out)


def bn_apply_kernel(y_ref, scale_ref, shift_ref, o_ref):
    # y_ref: (tile_nv, T_out, C_out_p); scale/shift: (1, 1, C_out_p) f32
    y = y_ref[...].astype(jnp.float32)
    o_ref[...] = (y * scale_ref[...] + shift_ref[...]).astype(o_ref.dtype)


def unit_tcn_forward(x_nchw, weight, bias, gamma, beta, *, stride=1, eps=1e-5):
    """x_nchw: (N, C_in, T, V); weight: (C_out, C_in, K, 1).  Returns NCHW."""
    N, C_in, T, V = x_nchw.shape
    C_out, _, K, _ = weight.shape
    pad = (K - 1) // 2
    t_out = (T + 2 * pad - K) // stride + 1
    NV = N * V
    in_dtype = x_nchw.dtype
    in_bytes = jnp.dtype(in_dtype).itemsize

    # The conv bias is a per-channel constant: it is exactly cancelled by
    # training-mode BatchNorm (mean shifts, variance unchanged) -> skip it.
    del bias

    c_out_p = _round_up(C_out, 128)       # lane-dense channel dim in-kernel

    # NCHW -> (N*V, T, C_in): channels on lanes, time on sublanes.
    x = jnp.transpose(x_nchw, (0, 3, 2, 1)).reshape(NV, T, C_in)

    tile_nv = _pick_tile_nv(NV, T, pad, C_in, t_out, c_out_p, in_bytes, K)
    nv_p = _round_up(NV, tile_nv)
    if nv_p != NV:
        # Zero rows give zero conv output (no bias), so BN sums are unaffected;
        # the true element count is used for the mean/variance below.
        x = jnp.pad(x, ((0, nv_p - NV), (0, 0), (0, 0)))
    grid = nv_p // tile_nv

    # Weights -> im2col layout (K*C_in, C_out_p), kept in the input dtype so the
    # MXU sees bf16 operands when the activations are bf16.
    w_col = jnp.transpose(weight[:, :, :, 0], (2, 1, 0)).reshape(K * C_in, C_out)
    w_col = jnp.pad(w_col, ((0, 0), (0, c_out_p - C_out))).astype(in_dtype)

    conv_kernel = functools.partial(conv_stats_kernel, kernel_size=K, pad=pad,
                                    stride=stride, t_out=t_out)
    cparams = pltpu.CompilerParams(dimension_semantics=("parallel",),
                                   vmem_limit_bytes=_VMEM_LIMIT_BYTES)

    scratch_shapes = []
    if pad > 0:
        scratch_shapes.append(pltpu.VMEM((tile_nv, T + 2 * pad, C_in), in_dtype))

    # Pass 1: conv (im2col matmul) + per-tile BN partial sums.
    # (w is grid-invariant; Pallas keeps the resident block -- only a few KB.)
    y, partial_stats = pl.pallas_call(
        conv_kernel,
        grid=(grid,),
        in_specs=[
            pl.BlockSpec((tile_nv, T, C_in), lambda i: (i, 0, 0)),
            pl.BlockSpec((K * C_in, c_out_p), lambda i: (0, 0)),
        ],
        out_specs=(
            pl.BlockSpec((tile_nv, t_out, c_out_p), lambda i: (i, 0, 0)),
            pl.BlockSpec((1, 2, c_out_p), lambda i: (i, 0, 0)),
        ),
        out_shape=(
            jax.ShapeDtypeStruct((nv_p, t_out, c_out_p), in_dtype),
            jax.ShapeDtypeStruct((grid, 2, c_out_p), jnp.float32),
        ),
        scratch_shapes=scratch_shapes,
        compiler_params=cparams,
    )(x, w_col)

    # Global training-mode BatchNorm statistics (biased variance) from partials.
    totals = jnp.sum(partial_stats, axis=0)             # (2, C_out_p)
    count = float(NV * t_out)                           # true element count
    mean = totals[0] / count
    var = totals[1] / count - mean * mean
    rstd = jax.lax.rsqrt(var + eps)
    gamma_p = jnp.pad(gamma.astype(jnp.float32), (0, c_out_p - C_out))
    beta_p = jnp.pad(beta.astype(jnp.float32), (0, c_out_p - C_out))
    scale = (gamma_p * rstd).reshape(1, 1, c_out_p)
    shift = (beta_p - mean * gamma_p * rstd).reshape(1, 1, c_out_p)

    # Pass 2: normalize (single FMA per element, lane-dense output).  The output
    # aliases the conv intermediate (same shape & dtype) -> no extra allocation.
    out = pl.pallas_call(
        bn_apply_kernel,
        grid=(grid,),
        in_specs=[
            pl.BlockSpec((tile_nv, t_out, c_out_p), lambda i: (i, 0, 0)),
            pl.BlockSpec((1, 1, c_out_p), lambda i: (0, 0, 0)),
            pl.BlockSpec((1, 1, c_out_p), lambda i: (0, 0, 0)),
        ],
        out_specs=pl.BlockSpec((tile_nv, t_out, c_out_p), lambda i: (i, 0, 0)),
        out_shape=jax.ShapeDtypeStruct((nv_p, t_out, c_out_p), in_dtype),
        input_output_aliases={0: 0},
        compiler_params=cparams,
    )(y, scale, shift)

    # (N*V, T_out, C_out_p) -> NCHW (N, C_out, T_out, V), dropping padding.
    out = out[:NV, :, :C_out].reshape(N, V, t_out, C_out)
    return jnp.transpose(out, (0, 3, 2, 1))


def reference_forward(x_nchw, weight, bias, gamma, beta, *, stride=1, eps=1e-5):
    K = weight.shape[2]
    pad = (K - 1) // 2
    y = jax.lax.conv_general_dilated(
        x_nchw, weight, window_strides=(stride, 1), padding=((pad, pad), (0, 0)),
        dimension_numbers=('NCHW', 'OIHW', 'NCHW'))
    y = y + bias.reshape(1, -1, 1, 1)
    mean = jnp.mean(y, axis=(0, 2, 3), keepdims=True)
    var = jnp.mean((y - mean) ** 2, axis=(0, 2, 3), keepdims=True)
    y = (y - mean) * jax.lax.rsqrt(var + eps)
    return y * gamma.reshape(1, -1, 1, 1) + beta.reshape(1, -1, 1, 1)


if __name__ == "__main__":
    # Small shapes consistent with unit_tcn's NCHW input: (N, C_in, T, V)
    N, C_in, T, V = 2, 4, 16, 5
    C_out, K = 8, 9

    key = jax.random.PRNGKey(0)
    kx, kw = jax.random.split(key)
    x = jax.random.normal(kx, (N, C_in, T, V), dtype=jnp.float32)

    # conv_init: kaiming_normal_(mode='fan_out') -> std = sqrt(2 / (C_out*K*1))
    w_std = math.sqrt(2.0 / (C_out * K * 1))
    weight = jax.random.normal(kw, (C_out, C_in, K, 1), dtype=jnp.float32) * w_std
    bias = jnp.zeros((C_out,), jnp.float32)      # conv bias init to 0
    gamma = jnp.ones((C_out,), jnp.float32)      # bn_init(bn, 1)
    beta = jnp.zeros((C_out,), jnp.float32)

    # stride = 1 (tiled over N*V: grid of 2 tiles + cross-tile BN reduction)
    out1 = jax.block_until_ready(unit_tcn_forward(x, weight, bias, gamma, beta, stride=1))
    ref1 = reference_forward(x, weight, bias, gamma, beta, stride=1)
    assert out1.shape == (N, C_out, T, V), out1.shape
    assert jnp.allclose(out1, ref1, atol=1e-4, rtol=1e-4), "stride=1 mismatch vs reference"

    # stride = 2 (exercises the strided tap reads)
    out2 = jax.block_until_ready(unit_tcn_forward(x, weight, bias, gamma, beta, stride=2))
    ref2 = reference_forward(x, weight, bias, gamma, beta, stride=2)
    assert out2.shape == ref2.shape, (out2.shape, ref2.shape)
    assert jnp.allclose(out2, ref2, atol=1e-4, rtol=1e-4), "stride=2 mismatch vs reference"

    # kernel_size = 1 (pad == 0: no halo scratch, direct tap read)
    w1 = jax.random.normal(kw, (C_out, C_in, 1, 1), dtype=jnp.float32) * math.sqrt(2.0 / C_out)
    out3 = jax.block_until_ready(unit_tcn_forward(x, w1, bias, gamma, beta, stride=1))
    ref3 = reference_forward(x, w1, bias, gamma, beta, stride=1)
    assert jnp.allclose(out3, ref3, atol=1e-4, rtol=1e-4), "k=1 mismatch vs reference"

    # bf16 activations/weights into the MXU, bf16 staging, f32 BN stats.
    out_bf = jax.block_until_ready(
        unit_tcn_forward(x.astype(jnp.bfloat16), weight.astype(jnp.bfloat16),
                         bias, gamma, beta, stride=1))
    assert out_bf.dtype == jnp.bfloat16
    assert jnp.allclose(out_bf.astype(jnp.float32), ref1, atol=5e-2, rtol=5e-2), \
        "bf16 mismatch vs reference"

    print("KERNEL_OK")
</pallas_src>

<mosaic_0001>
module attributes {stable_mosaic.version = 11 : i64} {
  func.func @conv_stats_kernel(%arg0: i32, %arg1: memref<8x16x4xf32, #tpu.memory_space<vmem>>, %arg2: memref<36x128xf32, #tpu.memory_space<vmem>>, %arg3: memref<8x16x128xf32, #tpu.memory_space<vmem>>, %arg4: memref<1x2x128xf32, #tpu.memory_space<vmem>>, %arg5: memref<8x24x4xf32, #tpu.memory_space<vmem>>) attributes {dimension_semantics = [#tpu.dimension_semantics<parallel>], iteration_bounds = array<i64: 2>, scalar_prefetch = 0 : i64, scratch_operands = 1 : i64, tpu.core_type = #tpu.core_type<tc>, window_params = [{transform_indices = @transform_0, window_bounds = array<i64: 8, 16, 4>}, {pipeline_mode = #tpu.pipeline_mode<synchronous>, transform_indices = @transform_1, window_bounds = array<i64: 36, 128>}, {transform_indices = @transform_2, window_bounds = array<i64: 8, 16, 128>}, {transform_indices = @transform_3, window_bounds = array<i64: 1, 2, 128>}]} {
    %cst = arith.constant 0.000000e+00 : f32
    %0 = vector.broadcast %cst : f32 to vector<8x4x4xf32>
    %c0 = arith.constant 0 : index
    %c0_0 = arith.constant 0 : index
    %c0_1 = arith.constant 0 : index
    %1 = vector.load %arg5[%c0, %c0_0, %c0_1] : memref<8x24x4xf32, #tpu.memory_space<vmem>>, vector<8x4x4xf32>
    tpu.vector_store %arg5[%c0, %c0_0, %c0_1], %0 {strides = array<i32>} : memref<8x24x4xf32, #tpu.memory_space<vmem>>, vector<8x4x4xf32>,
    %c0_2 = arith.constant 0 : index
    %c20 = arith.constant 20 : index
    %c0_3 = arith.constant 0 : index
    %2 = vector.load %arg5[%c0_2, %c20, %c0_3] : memref<8x24x4xf32, #tpu.memory_space<vmem>>, vector<8x4x4xf32>
    tpu.vector_store %arg5[%c0_2, %c20, %c0_3], %0 {strides = array<i32>} : memref<8x24x4xf32, #tpu.memory_space<vmem>>, vector<8x4x4xf32>,
    %c0_4 = arith.constant 0 : index
    %c0_5 = arith.constant 0 : index
    %c0_6 = arith.constant 0 : index
    %3 = vector.load %arg1[%c0_4, %c0_5, %c0_6] : memref<8x16x4xf32, #tpu.memory_space<vmem>>, vector<8x16x4xf32>
    %c0_7 = arith.constant 0 : index
    %c4 = arith.constant 4 : index
    %c0_8 = arith.constant 0 : index
    %4 = vector.load %arg5[%c0_7, %c4, %c0_8] : memref<8x24x4xf32, #tpu.memory_space<vmem>>, vector<8x16x4xf32>
    tpu.vector_store %arg5[%c0_7, %c4, %c0_8], %3 {strides = array<i32>} : memref<8x24x4xf32, #tpu.memory_space<vmem>>, vector<8x16x4xf32>,
    %c0_9 = arith.constant 0 : index
    %c0_10 = arith.constant 0 : index
    %c0_11 = arith.constant 0 : index
    %5 = vector.load %arg5[%c0_9, %c0_10, %c0_11] : memref<8x24x4xf32, #tpu.memory_space<vmem>>, vector<8x16x4xf32>
    %c0_12 = arith.constant 0 : index
    %c1 = arith.constant 1 : index
    %c0_13 = arith.constant 0 : index
    %6 = vector.load %arg5[%c0_12, %c1, %c0_13] : memref<8x24x4xf32, #tpu.memory_space<vmem>>, vector<8x16x4xf32>
    %c0_14 = arith.constant 0 : index
    %c2 = arith.constant 2 : index
    %c0_15 = arith.constant 0 : index
    %7 = vector.load %arg5[%c0_14, %c2, %c0_15] : memref<8x24x4xf32, #tpu.memory_space<vmem>>, vector<8x16x4xf32>
    %c0_16 = arith.constant 0 : index
    %c3 = arith.constant 3 : index
    %c0_17 = arith.constant 0 : index
    %8 = vector.load %arg5[%c0_16, %c3, %c0_17] : memref<8x24x4xf32, #tpu.memory_space<vmem>>, vector<8x16x4xf32>
    %c0_18 = arith.constant 0 : index
    %c4_19 = arith.constant 4 : index
    %c0_20 = arith.constant 0 : index
    %9 = vector.load %arg5[%c0_18, %c4_19, %c0_20] : memref<8x24x4xf32, #tpu.memory_space<vmem>>, vector<8x16x4xf32>
    %c0_21 = arith.constant 0 : index
    %c5 = arith.constant 5 : index
    %c0_22 = arith.constant 0 : index
    %10 = vector.load %arg5[%c0_21, %c5, %c0_22] : memref<8x24x4xf32, #tpu.memory_space<vmem>>, vector<8x16x4xf32>
    %c0_23 = arith.constant 0 : index
    %c6 = arith.constant 6 : index
    %c0_24 = arith.constant 0 : index
    %11 = vector.load %arg5[%c0_23, %c6, %c0_24] : memref<8x24x4xf32, #tpu.memory_space<vmem>>, vector<8x16x4xf32>
    %c0_25 = arith.constant 0 : index
    %c7 = arith.constant 7 : index
    %c0_26 = arith.constant 0 : index
    %12 = vector.load %arg5[%c0_25, %c7, %c0_26] : memref<8x24x4xf32, #tpu.memory_space<vmem>>, vector<8x16x4xf32>
    %c0_27 = arith.constant 0 : index
    %c8 = arith.constant 8 : index
    %c0_28 = arith.constant 0 : index
    %13 = vector.load %arg5[%c0_27, %c8, %c0_28] : memref<8x24x4xf32, #tpu.memory_space<vmem>>, vector<8x16x4xf32>
    %14 = tpu.concatenate %5, %6, %7, %8, %9, %10, %11, %12, %13 in 2 : vector<8x16x4xf32>, vector<8x16x4xf32>, vector<8x16x4xf32>, vector<8x16x4xf32>, vector<8x16x4xf32>, vector<8x16x4xf32>, vector<8x16x4xf32>, vector<8x16x4xf32>, vector<8x16x4xf32> -> vector<8x16x36xf32>
    %15 = vector.shape_cast %14 : vector<8x16x36xf32> to vector<128x36xf32>
    %c0_29 = arith.constant 0 : index
    %c0_30 = arith.constant 0 : index
    %16 = vector.load %arg2[%c0_29, %c0_30] : memref<36x128xf32, #tpu.memory_space<vmem>>, vector<36x128xf32>
    %cst_31 = arith.constant dense<0.000000e+00> : vector<128x128xf32>
    %17 = tpu.matmul %15, %16, %cst_31 {dimension_numbers = #tpu.dot_dimension_numbers<[1], [0], [0], [1], [0, 0, 1, 1], [], []>} : vector<128x36xf32>, vector<36x128xf32>, vector<128x128xf32> -> vector<128x128xf32>
    %18 = vector.shape_cast %17 : vector<128x128xf32> to vector<8x16x128xf32>
    %c0_32 = arith.constant 0 : index
    %c0_33 = arith.constant 0 : index
    %c0_34 = arith.constant 0 : index
    %19 = vector.load %arg3[%c0_32, %c0_33, %c0_34] : memref<8x16x128xf32, #tpu.memory_space<vmem>>, vector<8x16x128xf32>
    tpu.vector_store %arg3[%c0_32, %c0_33, %c0_34], %18 {strides = array<i32>} : memref<8x16x128xf32, #tpu.memory_space<vmem>>, vector<8x16x128xf32>,
    %cst_35 = arith.constant dense<0.000000e+00> : vector<128xf32>
    %20 = vector.multi_reduction <add>, %17, %cst_35 [0] : vector<128x128xf32> to vector<128xf32>
    %21 = vector.shape_cast %20 : vector<128xf32> to vector<1x128xf32>
    %22 = arith.mulf %17, %17 : vector<128x128xf32>
    %cst_36 = arith.constant dense<0.000000e+00> : vector<128xf32>
    %23 = vector.multi_reduction <add>, %22, %cst_36 [0] : vector<128x128xf32> to vector<128xf32>
    %24 = vector.shape_cast %23 : vector<128xf32> to vector<1x128xf32>
    %25 = tpu.concatenate %21, %24 in 0 : vector<1x128xf32>, vector<1x128xf32> -> vector<2x128xf32>
    %26 = vector.shape_cast %25 : vector<2x128xf32> to vector<1x2x128xf32>
    %c0_37 = arith.constant 0 : index
    %c0_38 = arith.constant 0 : index
    %c0_39 = arith.constant 0 : index
    %27 = vector.load %arg4[%c0_37, %c0_38, %c0_39] : memref<1x2x128xf32, #tpu.memory_space<vmem>>, vector<1x2x128xf32>
    tpu.vector_store %arg4[%c0_37, %c0_38, %c0_39], %26 {strides = array<i32>} : memref<1x2x128xf32, #tpu.memory_space<vmem>>, vector<1x2x128xf32>,
    return
  }
  func.func @transform_0(%arg0: i32) -> (i32, i32, i32) {
    %c0_i32 = arith.constant 0 : i32
    %c0_i32_0 = arith.constant 0 : i32
    %c0_i32_1 = arith.constant 0 : i32
    return %arg0, %c0_i32, %c0_i32_0 : i32, i32, i32
  }
  func.func @transform_1(%arg0: i32) -> (i32, i32) {
    %c0_i32 = arith.constant 0 : i32
    %c0_i32_0 = arith.constant 0 : i32
    %c0_i32_1 = arith.constant 0 : i32
    return %c0_i32, %c0_i32_0 : i32, i32
  }
  func.func @transform_2(%arg0: i32) -> (i32, i32, i32) {
    %c0_i32 = arith.constant 0 : i32
    %c0_i32_0 = arith.constant 0 : i32
    %c0_i32_1 = arith.constant 0 : i32
    return %arg0, %c0_i32, %c0_i32_0 : i32, i32, i32
  }
  func.func @transform_3(%arg0: i32) -> (i32, i32, i32) {
    %c0_i32 = arith.constant 0 : i32
    %c0_i32_0 = arith.constant 0 : i32
    %c0_i32_1 = arith.constant 0 : i32
    return %arg0, %c0_i32, %c0_i32_0 : i32, i32, i32
  }
}

</mosaic_0001>

<llo_original>
// kernel: tpu_custom_call.1
$region0: #{tpu_custom_call.1}
  #allocation0 [shape = 'u32[]', space=smem, size = 0x4, offset = 0x4, fixed_abs, tag = 'smem constant byte address 0x4 - core index']
  #allocation1 [shape = 'u32[144,128]{1,0:T(1,128)}', space=vmem, size = 0x12000, scoped, tag = 'internal scratch']
  #allocation2 [shape = 'f32[8,24,4]{2,1,0:T(8,128)}', space=vmem, size = 0x18000, scoped, tag = 'scratch operand']
  %s0 = inlined_call_operand.vmem [shape: f32[16,16,4], index: 0, kind: input, shape index: {}]
  %s1 = inlined_call_operand.vmem [shape: f32[36,128], index: 1, kind: input, shape index: {}]
  %s2 = inlined_call_operand.hbm [shape: f32[16,16,128], index: 2, kind: output, shape index: {0}]
  %s3 = inlined_call_operand.hbm [shape: f32[2,2,128], index: 3, kind: output, shape index: {1}]
  %4 = xla_tuple %s2, %s3
  %s5 = sld [smem:[#allocation0]]
  $region49: #{tpu_custom_call.1} parent=0
    _
  %s7 = ssub.s32 1, %s5
  %s8 = scalar_select 0, %s7, %s5
  $region1: #{tpu_custom_call.1} parent=0
    #allocation3 [shape = 'u8[131072]{0}', space=vmem, size = 0x20000, scoped, tag = 'output window, operand 0']
    #allocation4 [shape = 's32[2]{0}', space=sflag, size = 0x8, scoped, tag = 'scoped memory for tpu_custom_call.1']
    #allocation5 [shape = 'u8[2048]{0}', space=vmem, size = 0x800, scoped, tag = 'output window, operand 1']
    #allocation6 [shape = 's32[2]{0}', space=sflag, size = 0x8, scoped, tag = 'scoped memory for tpu_custom_call.1']
    %9 = vsyncpa [#allocation4], 0
    %s10 = scalar_lea.sflag [#allocation4], 1
    %11 = vsyncpa %s10, 0
    %12 = vsyncpa [#allocation6], 0
    %s13 = scalar_lea.sflag [#allocation6], 1
    %14 = vsyncpa %s13, 0
    loop: start=0, step=1, limit=4
    $region2: #{tpu_custom_call.1} parent=1 // loop_pre_header
      _
    $region3: #{tpu_custom_call.1} parent=1 // loop_header
      %s16 = sphi 0, %s20
      %p17 = scmp.ge.s32.totalorder %s16, 4
      %s26 = sphi 0, %s28
      %s29 = sphi 0, %s26
      %s30 = sphi 0, %s29
      %s46 = sphi 0, %s30
      %s50 = sphi 0, %s50
      %s52 = sphi 0, %s50
      %s53 = sphi 0, %s52
      %s67 = sphi 0, %s53
      %s73 = sphi 0, %s75
      %s76 = sphi 0, %s73
      %s77 = sphi 0, %s76
      %s93 = sphi 0, %s77
      %s99 = sphi 0, %s101
      %s102 = sphi 0, %s99
      %s103 = sphi 0, %s102
      %s119 = sphi 0, %s103
    $region4: #{tpu_custom_call.1} parent=1 // loop_header_branch
      %19 = sbr.rel (%p17) target = $region8
    $region5: #{tpu_custom_call.1} parent=1 // loop_body
      %s21 = ssub.s32 %s16, 1
      %s22 = ssub.s32 %s16, 2
      %s23 = sadd.s32 %s16, 1
      %s24 = ssub.s32 %s16, %s23
      %p25 = scmp.eq.s32.totalorder %s24, 0
      %s27 = sadd.s32 %s26, 1
      %s28 = scalar_select %p25, %s26, %s27
      %p31 = pneg %p25
      %p32 = scmp.eq.s32.totalorder %s16, 1
      %p33 = por %p31, %p32
      %p34 = scmp.ne.s32.totalorder %s26, %s29
      %p35 = scmp.eq.s32.totalorder %s16, 0
      %p36 = por %p34, %p35
      %p37 = scmp.ne.s32.totalorder %s26, %s29
      %p38 = scmp.eq.s32.totalorder %s21, 1
      %p39 = por %p37, %p38
      %p40 = scmp.ne.s32.totalorder %s29, %s30
      %p41 = scmp.eq.s32.totalorder %s21, 0
      %p42 = por %p40, %p41
      %p43 = scmp.ne.s32.totalorder %s29, %s30
      %p44 = scmp.eq.s32.totalorder %s22, 1
      %p45 = por %p43, %p44
      %p47 = scmp.ne.s32.totalorder %s30, %s46
      %p48 = scmp.eq.s32.totalorder %s22, 0
      %p49 = por %p47, %p48
      %s51 = sadd.s32 %s50, 1
      %p54 = scmp.eq.s32.totalorder %s16, 1
      %p55 = scmp.ne.s32.totalorder %s50, %s52
      %p56 = scmp.eq.s32.totalorder %s16, 0
      %p57 = por %p55, %p56
      %p58 = scmp.ne.s32.totalorder %s50, %s52
      %p59 = scmp.eq.s32.totalorder %s21, 1
      %p60 = por %p58, %p59
      %p61 = scmp.ne.s32.totalorder %s52, %s53
      %p62 = scmp.eq.s32.totalorder %s21, 0
      %p63 = por %p61, %p62
      %p64 = scmp.ne.s32.totalorder %s52, %s53
      %p65 = scmp.eq.s32.totalorder %s22, 1
      %p66 = por %p64, %p65
      %p68 = scmp.ne.s32.totalorder %s53, %s67
      %p69 = scmp.eq.s32.totalorder %s22, 0
      %p70 = por %p68, %p69
      %s71 = ssub.s32 %s16, %s23
      %p72 = scmp.eq.s32.totalorder %s71, 0
      %s74 = sadd.s32 %s73, 1
      %s75 = scalar_select %p72, %s73, %s74
      %p78 = pneg %p72
      %p79 = scmp.eq.s32.totalorder %s16, 1
      %p80 = por %p78, %p79
      %p81 = scmp.ne.s32.totalorder %s73, %s76
      %p82 = scmp.eq.s32.totalorder %s16, 0
      %p83 = por %p81, %p82
      %p84 = scmp.ne.s32.totalorder %s73, %s76
      %p85 = scmp.eq.s32.totalorder %s21, 1
      %p86 = por %p84, %p85
      %p87 = scmp.ne.s32.totalorder %s76, %s77
      %p88 = scmp.eq.s32.totalorder %s21, 0
      %p89 = por %p87, %p88
      %p90 = scmp.ne.s32.totalorder %s76, %s77
      %p91 = scmp.eq.s32.totalorder %s22, 1
      %p92 = por %p90, %p91
      %p94 = scmp.ne.s32.totalorder %s77, %s93
      %p95 = scmp.eq.s32.totalorder %s22, 0
      %p96 = por %p94, %p95
      %s97 = ssub.s32 %s16, %s23
      %p98 = scmp.eq.s32.totalorder %s97, 0
      %s100 = sadd.s32 %s99, 1
      %s101 = scalar_select %p98, %s99, %s100
      %p104 = pneg %p98
      %p105 = scmp.eq.s32.totalorder %s16, 1
      %p106 = por %p104, %p105
      %p107 = scmp.ne.s32.totalorder %s99, %s102
      %p108 = scmp.eq.s32.totalorder %s16, 0
      %p109 = por %p107, %p108
      %p110 = scmp.ne.s32.totalorder %s99, %s102
      %p111 = scmp.eq.s32.totalorder %s21, 1
      %p112 = por %p110, %p111
      %p113 = scmp.ne.s32.totalorder %s102, %s103
      %p114 = scmp.eq.s32.totalorder %s21, 0
      %p115 = por %p113, %p114
      %p116 = scmp.ne.s32.totalorder %s102, %s103
      %p117 = scmp.eq.s32.totalorder %s22, 1
      %p118 = por %p116, %p117
      %p120 = scmp.ne.s32.totalorder %s103, %s119
      %p121 = scmp.eq.s32.totalorder %s22, 0
      %p122 = por %p120, %p121
      %p123 = scmp.le.s32.totalorder 1, %s16
      %p124 = scmp.lt.s32.totalorder %s16, 3
      %p125 = pnand %p123, %p124
      %p126 = pneg %p125
      // Predicated region
      $region9: #{tpu_custom_call.1} parent=5 // pred_check
        _
      $region10: #{tpu_custom_call.1} parent=5 // pred_check_branch
        %128 = sbr.rel (%p125) target = $region12
      $region11: #{tpu_custom_call.1} parent=5 // pred_region
        %s129 = ssub.s32 %s16, 1
        // Predicated region
        $region13: #{tpu_custom_call.1} parent=11 // pred_check
          %p130 = pneg %p63
        $region14: #{tpu_custom_call.1} parent=11 // pred_check_branch
          %132 = sbr.rel (%p130) target = $region16
        $region15: #{tpu_custom_call.1} parent=11 // pred_region
          _
        $region16: #{tpu_custom_call.1} parent=11 // pred_fallthru
          _
      $region12: #{tpu_custom_call.1} parent=5 // pred_fallthru
        _
      %p133 = scmp.lt.s32.totalorder %s16, 2
      // Predicated region
      $region17: #{tpu_custom_call.1} parent=5 // pred_check
        %p134 = pneg %p133
      $region18: #{tpu_custom_call.1} parent=5 // pred_check_branch
        %136 = sbr.rel (%p134) target = $region20
      $region19: #{tpu_custom_call.1} parent=5 // pred_region
        // Predicated region
        $region21: #{tpu_custom_call.1} parent=19 // pred_check
          %p137 = pneg %p36
        $region22: #{tpu_custom_call.1} parent=19 // pred_check_branch
          %139 = sbr.rel (%p137) target = $region24
        $region23: #{tpu_custom_call.1} parent=19 // pred_region
          %s140 = smul.u32 8, %s16
          %p141 = scmp.lt.s32.totalorder %s140, 15
          %s142 = scalar_select %p141, %s140, 15
          %s143 = smul.addr %s142, 2
          %s144 = smul.addr %s143, 8
          %s145 = scalar_lea.vmem %s0, %s144
          %s146 = smul.u32 8, %s16
        $region24: #{tpu_custom_call.1} parent=19 // pred_fallthru
          _
      $region20: #{tpu_custom_call.1} parent=5 // pred_fallthru
        _
      %p147 = scmp.le.s32.totalorder 1, %s16
      %p148 = scmp.lt.s32.totalorder %s16, 3
      %p149 = pnand %p147, %p148
      %p150 = pneg %p149
      // Predicated region
      $region25: #{tpu_custom_call.1} parent=5 // pred_check
        _
      $region26: #{tpu_custom_call.1} parent=5 // pred_check_branch
        %152 = sbr.rel (%p149) target = $region28
      $region27: #{tpu_custom_call.1} parent=5 // pred_region
        %s153 = ssub.s32 %s16, 1
        %s154 = smul.u32 8, %s21
        %p155 = scmp.lt.s32.totalorder %s154, 15
        %s156 = scalar_select %p155, %s154, 15
        %s157 = smul.addr %s156, 2
        %s158 = smul.addr %s157, 8
        %s159 = scalar_lea.vmem %s0, %s158
        %p160 = pneg %p42
        %p161 = pneg %p39
        %p162 = pneg %p63
        %p163 = pneg %p60
        %p164 = pneg %p89
        %p165 = pneg %p86
        %s166 = sand.u32 %s76, 1
        %s167 = scalar_lea.sflag [#allocation4], %s166
        %s168 = sand.u32 %s76, 1
        %s169 = smul.addr %s168, 128
        %s170 = scalar_lea.vmem [#allocation3], %s169
        %p171 = pneg %p115
        %p172 = pneg %p112
        %s173 = sand.u32 %s102, 1
        %s174 = scalar_lea.sflag [#allocation6], %s173
        %s175 = sand.u32 %s102, 1
        %s176 = smul.addr %s175, 2
        %s177 = scalar_lea.vmem [#allocation5], %s176
        %s178 = smul.u32 8, %s21
        %p179 = scmp.lt.s32.totalorder %s178, 15
        %s180 = scalar_select %p179, %s178, 15
        %s181 = smul.addr %s180, 2
        %s182 = smul.addr %s181, 8
        %s183 = scalar_lea.vmem %s0, %s182
        %s184 = smul.u32 8, %s21
        %s185 = smul.u32 8, %s21
        %vm186 = vcmask 27648
        %187 = vst.msk [vmem:[#allocation2] sm:$0xf] %vm186, 0.0
        %188 = vst.msk [vmem:[#allocation2 + $0x18] sm:$0xf] %vm186, 0.0
        %189 = vst.msk [vmem:[#allocation2 + $0x30] sm:$0xf] %vm186, 0.0
        %190 = vst.msk [vmem:[#allocation2 + $0x48] sm:$0xf] %vm186, 0.0
        %191 = vst.msk [vmem:[#allocation2 + $0x60] sm:$0xf] %vm186, 0.0
        %192 = vst.msk [vmem:[#allocation2 + $0x78] sm:$0xf] %vm186, 0.0
        %193 = vst.msk [vmem:[#allocation2 + $0x90] sm:$0xf] %vm186, 0.0
        %194 = vst.msk [vmem:[#allocation2 + $0xa8] sm:$0xf] %vm186, 0.0
        %195 = vst.msk [vmem:[#allocation2 + $0x14] sm:$0xf] %vm186, 0.0
        %196 = vst.msk [vmem:[#allocation2 + $0x2c] sm:$0xf] %vm186, 0.0
        %197 = vst.msk [vmem:[#allocation2 + $0x44] sm:$0xf] %vm186, 0.0
        %198 = vst.msk [vmem:[#allocation2 + $0x5c] sm:$0xf] %vm186, 0.0
        %199 = vst.msk [vmem:[#allocation2 + $0x74] sm:$0xf] %vm186, 0.0
        %200 = vst.msk [vmem:[#allocation2 + $0x8c] sm:$0xf] %vm186, 0.0
        %201 = vst.msk [vmem:[#allocation2 + $0xa4] sm:$0xf] %vm186, 0.0
        %202 = vst.msk [vmem:[#allocation2 + $0xbc] sm:$0xf] %vm186, 0.0
        %v203 = vld [vmem:[%s183] sm:$0xff]
        %v204 = vld [vmem:[%s183 + $0x8] sm:$0xff]
        %v205 = vld [vmem:[%s183 + $0x10] sm:$0xff]
        %v206 = vld [vmem:[%s183 + $0x18] sm:$0xff]
        %v207 = vld [vmem:[%s183 + $0x20] sm:$0xff]
        %v208 = vld [vmem:[%s183 + $0x28] sm:$0xff]
        %v209 = vld [vmem:[%s183 + $0x30] sm:$0xff]
        %v210 = vld [vmem:[%s183 + $0x38] sm:$0xff]
        %v211 = vld [vmem:[%s183 + $0x40] sm:$0xff]
        %v212 = vld [vmem:[%s183 + $0x48] sm:$0xff]
        %v213 = vld [vmem:[%s183 + $0x50] sm:$0xff]
        %v214 = vld [vmem:[%s183 + $0x58] sm:$0xff]
        %v215 = vld [vmem:[%s183 + $0x60] sm:$0xff]
        %v216 = vld [vmem:[%s183 + $0x68] sm:$0xff]
        %v217 = vld [vmem:[%s183 + $0x70] sm:$0xff]
        %v218 = vld [vmem:[%s183 + $0x78] sm:$0xff]
        %vm219 = vcmask 31744
        %220 = vst.msk [vmem:[#allocation2 + $0x4] sm:$0xff] %vm219, %v203
        %221 = vst.msk [vmem:[#allocation2 + $0xc] sm:$0xff] %vm219, %v204
        %222 = vst.msk [vmem:[#allocation2 + $0x1c] sm:$0xff] %vm219, %v205
        %223 = vst.msk [vmem:[#allocation2 + $0x24] sm:$0xff] %vm219, %v206
        %224 = vst.msk [vmem:[#allocation2 + $0x34] sm:$0xff] %vm219, %v207
        %225 = vst.msk [vmem:[#allocation2 + $0x3c] sm:$0xff] %vm219, %v208
        %226 = vst.msk [vmem:[#allocation2 + $0x4c] sm:$0xff] %vm219, %v209
        %227 = vst.msk [vmem:[#allocation2 + $0x54] sm:$0xff] %vm219, %v210
        %228 = vst.msk [vmem:[#allocation2 + $0x64] sm:$0xff] %vm219, %v211
        %229 = vst.msk [vmem:[#allocation2 + $0x6c] sm:$0xff] %vm219, %v212
        %230 = vst.msk [vmem:[#allocation2 + $0x7c] sm:$0xff] %vm219, %v213
        %231 = vst.msk [vmem:[#allocation2 + $0x84] sm:$0xff] %vm219, %v214
        %232 = vst.msk [vmem:[#allocation2 + $0x94] sm:$0xff] %vm219, %v215
        %233 = vst.msk [vmem:[#allocation2 + $0x9c] sm:$0xff] %vm219, %v216
        %234 = vst.msk [vmem:[#allocation2 + $0xac] sm:$0xff] %vm219, %v217
        %235 = vst.msk [vmem:[#allocation2 + $0xb4] sm:$0xff] %vm219, %v218
        %v236 = vld [vmem:[#allocation2] sm:$0xff]
        %v237 = vld [vmem:[#allocation2 + $0x8] sm:$0xff]
        %v238 = vld [vmem:[#allocation2 + $0x18] sm:$0xff]
        %v239 = vld [vmem:[#allocation2 + $0x20] sm:$0xff]
        %v240 = vld [vmem:[#allocation2 + $0x30] sm:$0xff]
        %v241 = vld [vmem:[#allocation2 + $0x38] sm:$0xff]
        %v242 = vld [vmem:[#allocation2 + $0x48] sm:$0xff]
        %v243 = vld [vmem:[#allocation2 + $0x50] sm:$0xff]
        %v244 = vld [vmem:[#allocation2 + $0x60] sm:$0xff]
        %v245 = vld [vmem:[#allocation2 + $0x68] sm:$0xff]
        %v246 = vld [vmem:[#allocation2 + $0x78] sm:$0xff]
        %v247 = vld [vmem:[#allocation2 + $0x80] sm:$0xff]
        %v248 = vld [vmem:[#allocation2 + $0x90] sm:$0xff]
        %v249 = vld [vmem:[#allocation2 + $0x98] sm:$0xff]
        %v250 = vld [vmem:[#allocation2 + $0xa8] sm:$0xff]
        %v251 = vld [vmem:[#allocation2 + $0xb0] sm:$0xff]
        %v252 = vld [vmem:[#allocation2 + $0x1] sm:$0xff]
        %v253 = vld [vmem:[#allocation2 + $0x9] sm:$0xff]
        %v254 = vld [vmem:[#allocation2 + $0x19] sm:$0xff]
        %v255 = vld [vmem:[#allocation2 + $0x21] sm:$0xff]
        %v256 = vld [vmem:[#allocation2 + $0x31] sm:$0xff]
        %v257 = vld [vmem:[#allocation2 + $0x39] sm:$0xff]
        %v258 = vld [vmem:[#allocation2 + $0x49] sm:$0xff]
        %v259 = vld [vmem:[#allocation2 + $0x51] sm:$0xff]
        %v260 = vld [vmem:[#allocation2 + $0x61] sm:$0xff]
        %v261 = vld [vmem:[#allocation2 + $0x69] sm:$0xff]
        %v262 = vld [vmem:[#allocation2 + $0x79] sm:$0xff]
        %v263 = vld [vmem:[#allocation2 + $0x81] sm:$0xff]
        %v264 = vld [vmem:[#allocation2 + $0x91] sm:$0xff]
        %v265 = vld [vmem:[#allocation2 + $0x99] sm:$0xff]
        %v266 = vld [vmem:[#allocation2 + $0xa9] sm:$0xff]
        %v267 = vld [vmem:[#allocation2 + $0xb1] sm:$0xff]
        %v268 = vld [vmem:[#allocation2 + $0x2] sm:$0xff]
        %v269 = vld [vmem:[#allocation2 + $0xa] sm:$0xff]
        %v270 = vld [vmem:[#allocation2 + $0x1a] sm:$0xff]
        %v271 = vld [vmem:[#allocation2 + $0x22] sm:$0xff]
        %v272 = vld [vmem:[#allocation2 + $0x32] sm:$0xff]
        %v273 = vld [vmem:[#allocation2 + $0x3a] sm:$0xff]
        %v274 = vld [vmem:[#allocation2 + $0x4a] sm:$0xff]
        %v275 = vld [vmem:[#allocation2 + $0x52] sm:$0xff]
        %v276 = vld [vmem:[#allocation2 + $0x62] sm:$0xff]
        %v277 = vld [vmem:[#allocation2 + $0x6a] sm:$0xff]
        %v278 = vld [vmem:[#allocation2 + $0x7a] sm:$0xff]
        %v279 = vld [vmem:[#allocation2 + $0x82] sm:$0xff]
        %v280 = vld [vmem:[#allocation2 + $0x92] sm:$0xff]
        %v281 = vld [vmem:[#allocation2 + $0x9a] sm:$0xff]
        %v282 = vld [vmem:[#allocation2 + $0xaa] sm:$0xff]
        %v283 = vld [vmem:[#allocation2 + $0xb2] sm:$0xff]
        %v284 = vld [vmem:[#allocation2 + $0x3] sm:$0xff]
        %v285 = vld [vmem:[#allocation2 + $0xb] sm:$0xff]
        %v286 = vld [vmem:[#allocation2 + $0x1b] sm:$0xff]
        %v287 = vld [vmem:[#allocation2 + $0x23] sm:$0xff]
        %v288 = vld [vmem:[#allocation2 + $0x33] sm:$0xff]
        %v289 = vld [vmem:[#allocation2 + $0x3b] sm:$0xff]
        %v290 = vld [vmem:[#allocation2 + $0x4b] sm:$0xff]
        %v291 = vld [vmem:[#allocation2 + $0x53] sm:$0xff]
        %v292 = vld [vmem:[#allocation2 + $0x63] sm:$0xff]
        %v293 = vld [vmem:[#allocation2 + $0x6b] sm:$0xff]
        %v294 = vld [vmem:[#allocation2 + $0x7b] sm:$0xff]
        %v295 = vld [vmem:[#allocation2 + $0x83] sm:$0xff]
        %v296 = vld [vmem:[#allocation2 + $0x93] sm:$0xff]
        %v297 = vld [vmem:[#allocation2 + $0x9b] sm:$0xff]
        %v298 = vld [vmem:[#allocation2 + $0xab] sm:$0xff]
        %v299 = vld [vmem:[#allocation2 + $0xb3] sm:$0xff]
        %v300 = vld [vmem:[#allocation2 + $0x4] sm:$0xff]
        %v301 = vld [vmem:[#allocation2 + $0xc] sm:$0xff]
        %v302 = vld [vmem:[#allocation2 + $0x1c] sm:$0xff]
        %v303 = vld [vmem:[#allocation2 + $0x24] sm:$0xff]
        %v304 = vld [vmem:[#allocation2 + $0x34] sm:$0xff]
        %v305 = vld [vmem:[#allocation2 + $0x3c] sm:$0xff]
        %v306 = vld [vmem:[#allocation2 + $0x4c] sm:$0xff]
        %v307 = vld [vmem:[#allocation2 + $0x54] sm:$0xff]
        %v308 = vld [vmem:[#allocation2 + $0x64] sm:$0xff]
        %v309 = vld [vmem:[#allocation2 + $0x6c] sm:$0xff]
        %v310 = vld [vmem:[#allocation2 + $0x7c] sm:$0xff]
        %v311 = vld [vmem:[#allocation2 + $0x84] sm:$0xff]
        %v312 = vld [vmem:[#allocation2 + $0x94] sm:$0xff]
        %v313 = vld [vmem:[#allocation2 + $0x9c] sm:$0xff]
        %v314 = vld [vmem:[#allocation2 + $0xac] sm:$0xff]
        %v315 = vld [vmem:[#allocation2 + $0xb4] sm:$0xff]
        %v316 = vld [vmem:[#allocation2 + $0x5] sm:$0xff]
        %v317 = vld [vmem:[#allocation2 + $0xd] sm:$0xff]
        %v318 = vld [vmem:[#allocation2 + $0x1d] sm:$0xff]
        %v319 = vld [vmem:[#allocation2 + $0x25] sm:$0xff]
        %v320 = vld [vmem:[#allocation2 + $0x35] sm:$0xff]
        %v321 = vld [vmem:[#allocation2 + $0x3d] sm:$0xff]
        %v322 = vld [vmem:[#allocation2 + $0x4d] sm:$0xff]
        %v323 = vld [vmem:[#allocation2 + $0x55] sm:$0xff]
        %v324 = vld [vmem:[#allocation2 + $0x65] sm:$0xff]
        %v325 = vld [vmem:[#allocation2 + $0x6d] sm:$0xff]
        %v326 = vld [vmem:[#allocation2 + $0x7d] sm:$0xff]
        %v327 = vld [vmem:[#allocation2 + $0x85] sm:$0xff]
        %v328 = vld [vmem:[#allocation2 + $0x95] sm:$0xff]
        %v329 = vld [vmem:[#allocation2 + $0x9d] sm:$0xff]
        %v330 = vld [vmem:[#allocation2 + $0xad] sm:$0xff]
        %v331 = vld [vmem:[#allocation2 + $0xb5] sm:$0xff]
        %v332 = vld [vmem:[#allocation2 + $0x6] sm:$0xff]
        %v333 = vld [vmem:[#allocation2 + $0xe] sm:$0xff]
        %v334 = vld [vmem:[#allocation2 + $0x1e] sm:$0xff]
        %v335 = vld [vmem:[#allocation2 + $0x26] sm:$0xff]
        %v336 = vld [vmem:[#allocation2 + $0x36] sm:$0xff]
        %v337 = vld [vmem:[#allocation2 + $0x3e] sm:$0xff]
        %v338 = vld [vmem:[#allocation2 + $0x4e] sm:$0xff]
        %v339 = vld [vmem:[#allocation2 + $0x56] sm:$0xff]
        %v340 = vld [vmem:[#allocation2 + $0x66] sm:$0xff]
        %v341 = vld [vmem:[#allocation2 + $0x6e] sm:$0xff]
        %v342 = vld [vmem:[#allocation2 + $0x7e] sm:$0xff]
        %v343 = vld [vmem:[#allocation2 + $0x86] sm:$0xff]
        %v344 = vld [vmem:[#allocation2 + $0x96] sm:$0xff]
        %v345 = vld [vmem:[#allocation2 + $0x9e] sm:$0xff]
        %v346 = vld [vmem:[#allocation2 + $0xae] sm:$0xff]
        %v347 = vld [vmem:[#allocation2 + $0xb6] sm:$0xff]
        %v348 = vld [vmem:[#allocation2 + $0x7] sm:$0xff]
        %v349 = vld [vmem:[#allocation2 + $0xf] sm:$0xff]
        %v350 = vld [vmem:[#allocation2 + $0x1f] sm:$0xff]
        %v351 = vld [vmem:[#allocation2 + $0x27] sm:$0xff]
        %v352 = vld [vmem:[#allocation2 + $0x37] sm:$0xff]
        %v353 = vld [vmem:[#allocation2 + $0x3f] sm:$0xff]
        %v354 = vld [vmem:[#allocation2 + $0x4f] sm:$0xff]
        %v355 = vld [vmem:[#allocation2 + $0x57] sm:$0xff]
        %v356 = vld [vmem:[#allocation2 + $0x67] sm:$0xff]
        %v357 = vld [vmem:[#allocation2 + $0x6f] sm:$0xff]
        %v358 = vld [vmem:[#allocation2 + $0x7f] sm:$0xff]
        %v359 = vld [vmem:[#allocation2 + $0x87] sm:$0xff]
        %v360 = vld [vmem:[#allocation2 + $0x97] sm:$0xff]
        %v361 = vld [vmem:[#allocation2 + $0x9f] sm:$0xff]
        %v362 = vld [vmem:[#allocation2 + $0xaf] sm:$0xff]
        %v363 = vld [vmem:[#allocation2 + $0xb7] sm:$0xff]
        %v364 = vld [vmem:[#allocation2 + $0x10] sm:$0xff]
        %v365 = vld [vmem:[#allocation2 + $0x28] sm:$0xff]
        %v366 = vld [vmem:[#allocation2 + $0x40] sm:$0xff]
        %v367 = vld [vmem:[#allocation2 + $0x58] sm:$0xff]
        %v368 = vld [vmem:[#allocation2 + $0x70] sm:$0xff]
        %v369 = vld [vmem:[#allocation2 + $0x88] sm:$0xff]
        %v370 = vld [vmem:[#allocation2 + $0xa0] sm:$0xff]
        %v371 = vld [vmem:[#allocation2 + $0xb8] sm:$0xff]
        %388 = vrot.lane.b32.xlu0 %v252, 4
        %v389 = vpop.permute.xlu0 %388
        %390 = vrot.lane.b32.xlu0 %v253, 4
        %v391 = vpop.permute.xlu0 %390
        %392 = vrot.lane.b32.xlu0 %v254, 4
        %v393 = vpop.permute.xlu0 %392
        %394 = vrot.lane.b32.xlu0 %v255, 4
        %v395 = vpop.permute.xlu0 %394
        %396 = vrot.lane.b32.xlu0 %v256, 4
        %v397 = vpop.permute.xlu0 %396
        %398 = vrot.lane.b32.xlu0 %v257, 4
        %v399 = vpop.permute.xlu0 %398
        %400 = vrot.lane.b32.xlu0 %v258, 4
        %v401 = vpop.permute.xlu0 %400
        %402 = vrot.lane.b32.xlu0 %v259, 4
        %v403 = vpop.permute.xlu0 %402
        %404 = vrot.lane.b32.xlu0 %v260, 4
        %v405 = vpop.permute.xlu0 %404
        %406 = vrot.lane.b32.xlu0 %v261, 4
        %v407 = vpop.permute.xlu0 %406
        %408 = vrot.lane.b32.xlu0 %v262, 4
        %v409 = vpop.permute.xlu0 %408
        %410 = vrot.lane.b32.xlu0 %v263, 4
        %v411 = vpop.permute.xlu0 %410
        %412 = vrot.lane.b32.xlu0 %v264, 4
        %v413 = vpop.permute.xlu0 %412
        %414 = vrot.lane.b32.xlu0 %v265, 4
        %v415 = vpop.permute.xlu0 %414
        %416 = vrot.lane.b32.xlu0 %v266, 4
        %v417 = vpop.permute.xlu0 %416
        %418 = vrot.lane.b32.xlu0 %v267, 4
        %v419 = vpop.permute.xlu0 %418
        %452 = vrot.lane.b32.xlu0 %v268, 8
        %v453 = vpop.permute.xlu0 %452
        %454 = vrot.lane.b32.xlu0 %v269, 8
        %v455 = vpop.permute.xlu0 %454
        %456 = vrot.lane.b32.xlu0 %v270, 8
        %v457 = vpop.permute.xlu0 %456
        %458 = vrot.lane.b32.xlu0 %v271, 8
        %v459 = vpop.permute.xlu0 %458
        %460 = vrot.lane.b32.xlu0 %v272, 8
        %v461 = vpop.permute.xlu0 %460
        %462 = vrot.lane.b32.xlu0 %v273, 8
        %v463 = vpop.permute.xlu0 %462
        %464 = vrot.lane.b32.xlu0 %v274, 8
        %v465 = vpop.permute.xlu0 %464
        %466 = vrot.lane.b32.xlu0 %v275, 8
        %v467 = vpop.permute.xlu0 %466
        %468 = vrot.lane.b32.xlu0 %v276, 8
        %v469 = vpop.permute.xlu0 %468
        %470 = vrot.lane.b32.xlu0 %v277, 8
        %v471 = vpop.permute.xlu0 %470
        %472 = vrot.lane.b32.xlu0 %v278, 8
        %v473 = vpop.permute.xlu0 %472
        %474 = vrot.lane.b32.xlu0 %v279, 8
        %v475 = vpop.permute.xlu0 %474
        %476 = vrot.lane.b32.xlu0 %v280, 8
        %v477 = vpop.permute.xlu0 %476
        %478 = vrot.lane.b32.xlu0 %v281, 8
        %v479 = vpop.permute.xlu0 %478
        %480 = vrot.lane.b32.xlu0 %v282, 8
        %v481 = vpop.permute.xlu0 %480
        %482 = vrot.lane.b32.xlu0 %v283, 8
        %v483 = vpop.permute.xlu0 %482
        %516 = vrot.lane.b32.xlu0 %v284, 12
        %v517 = vpop.permute.xlu0 %516
        %518 = vrot.lane.b32.xlu0 %v285, 12
        %v519 = vpop.permute.xlu0 %518
        %520 = vrot.lane.b32.xlu0 %v286, 12
        %v521 = vpop.permute.xlu0 %520
        %522 = vrot.lane.b32.xlu0 %v287, 12
        %v523 = vpop.permute.xlu0 %522
        %524 = vrot.lane.b32.xlu0 %v288, 12
        %v525 = vpop.permute.xlu0 %524
        %526 = vrot.lane.b32.xlu0 %v289, 12
        %v527 = vpop.permute.xlu0 %526
        %528 = vrot.lane.b32.xlu0 %v290, 12
        %v529 = vpop.permute.xlu0 %528
        %530 = vrot.lane.b32.xlu0 %v291, 12
        %v531 = vpop.permute.xlu0 %530
        %532 = vrot.lane.b32.xlu0 %v292, 12
        %v533 = vpop.permute.xlu0 %532
        %534 = vrot.lane.b32.xlu0 %v293, 12
        %v535 = vpop.permute.xlu0 %534
        %536 = vrot.lane.b32.xlu0 %v294, 12
        %v537 = vpop.permute.xlu0 %536
        %538 = vrot.lane.b32.xlu0 %v295, 12
        %v539 = vpop.permute.xlu0 %538
        %540 = vrot.lane.b32.xlu0 %v296, 12
        %v541 = vpop.permute.xlu0 %540
        %542 = vrot.lane.b32.xlu0 %v297, 12
        %v543 = vpop.permute.xlu0 %542
        %544 = vrot.lane.b32.xlu0 %v298, 12
        %v545 = vpop.permute.xlu0 %544
        %546 = vrot.lane.b32.xlu0 %v299, 12
        %v547 = vpop.permute.xlu0 %546
        %580 = vrot.lane.b32.xlu0 %v300, 16
        %v581 = vpop.permute.xlu0 %580
        %582 = vrot.lane.b32.xlu0 %v301, 16
        %v583 = vpop.permute.xlu0 %582
        %584 = vrot.lane.b32.xlu0 %v302, 16
        %v585 = vpop.permute.xlu0 %584
        %586 = vrot.lane.b32.xlu0 %v303, 16
        %v587 = vpop.permute.xlu0 %586
        %588 = vrot.lane.b32.xlu0 %v304, 16
        %v589 = vpop.permute.xlu0 %588
        %590 = vrot.lane.b32.xlu0 %v305, 16
        %v591 = vpop.permute.xlu0 %590
        %592 = vrot.lane.b32.xlu0 %v306, 16
        %v593 = vpop.permute.xlu0 %592
        %594 = vrot.lane.b32.xlu0 %v307, 16
        %v595 = vpop.permute.xlu0 %594
        %596 = vrot.lane.b32.xlu0 %v308, 16
        %v597 = vpop.permute.xlu0 %596
        %598 = vrot.lane.b32.xlu0 %v309, 16
        %v599 = vpop.permute.xlu0 %598
        %600 = vrot.lane.b32.xlu0 %v310, 16
        %v601 = vpop.permute.xlu0 %600
        %602 = vrot.lane.b32.xlu0 %v311, 16
        %v603 = vpop.permute.xlu0 %602
        %604 = vrot.lane.b32.xlu0 %v312, 16
        %v605 = vpop.permute.xlu0 %604
        %606 = vrot.lane.b32.xlu0 %v313, 16
        %v607 = vpop.permute.xlu0 %606
        %608 = vrot.lane.b32.xlu0 %v314, 16
        %v609 = vpop.permute.xlu0 %608
        %610 = vrot.lane.b32.xlu0 %v315, 16
        %v611 = vpop.permute.xlu0 %610
        %644 = vrot.lane.b32.xlu0 %v316, 20
        %v645 = vpop.permute.xlu0 %644
        %646 = vrot.lane.b32.xlu0 %v317, 20
        %v647 = vpop.permute.xlu0 %646
        %648 = vrot.lane.b32.xlu0 %v318, 20
        %v649 = vpop.permute.xlu0 %648
        %650 = vrot.lane.b32.xlu0 %v319, 20
        %v651 = vpop.permute.xlu0 %650
        %652 = vrot.lane.b32.xlu0 %v320, 20
        %v653 = vpop.permute.xlu0 %652
        %654 = vrot.lane.b32.xlu0 %v321, 20
        %v655 = vpop.permute.xlu0 %654
        %656 = vrot.lane.b32.xlu0 %v322, 20
        %v657 = vpop.permute.xlu0 %656
        %658 = vrot.lane.b32.xlu0 %v323, 20
        %v659 = vpop.permute.xlu0 %658
        %660 = vrot.lane.b32.xlu0 %v324, 20
        %v661 = vpop.permute.xlu0 %660
        %662 = vrot.lane.b32.xlu0 %v325, 20
        %v663 = vpop.permute.xlu0 %662
        %664 = vrot.lane.b32.xlu0 %v326, 20
        %v665 = vpop.permute.xlu0 %664
        %666 = vrot.lane.b32.xlu0 %v327, 20
        %v667 = vpop.permute.xlu0 %666
        %668 = vrot.lane.b32.xlu0 %v328, 20
        %v669 = vpop.permute.xlu0 %668
        %670 = vrot.lane.b32.xlu0 %v329, 20
        %v671 = vpop.permute.xlu0 %670
        %672 = vrot.lane.b32.xlu0 %v330, 20
        %v673 = vpop.permute.xlu0 %672
        %674 = vrot.lane.b32.xlu0 %v331, 20
        %v675 = vpop.permute.xlu0 %674
        %708 = vrot.lane.b32.xlu0 %v332, 24
        %v709 = vpop.permute.xlu0 %708
        %710 = vrot.lane.b32.xlu0 %v333, 24
        %v711 = vpop.permute.xlu0 %710
        %712 = vrot.lane.b32.xlu0 %v334, 24
        %v713 = vpop.permute.xlu0 %712
        %714 = vrot.lane.b32.xlu0 %v335, 24
        %v715 = vpop.permute.xlu0 %714
        %716 = vrot.lane.b32.xlu0 %v336, 24
        %v717 = vpop.permute.xlu0 %716
        %718 = vrot.lane.b32.xlu0 %v337, 24
        %v719 = vpop.permute.xlu0 %718
        %720 = vrot.lane.b32.xlu0 %v338, 24
        %v721 = vpop.permute.xlu0 %720
        %722 = vrot.lane.b32.xlu0 %v339, 24
        %v723 = vpop.permute.xlu0 %722
        %724 = vrot.lane.b32.xlu0 %v340, 24
        %v725 = vpop.permute.xlu0 %724
        %726 = vrot.lane.b32.xlu0 %v341, 24
        %v727 = vpop.permute.xlu0 %726
        %728 = vrot.lane.b32.xlu0 %v342, 24
        %v729 = vpop.permute.xlu0 %728
        %730 = vrot.lane.b32.xlu0 %v343, 24
        %v731 = vpop.permute.xlu0 %730
        %732 = vrot.lane.b32.xlu0 %v344, 24
        %v733 = vpop.permute.xlu0 %732
        %734 = vrot.lane.b32.xlu0 %v345, 24
        %v735 = vpop.permute.xlu0 %734
        %736 = vrot.lane.b32.xlu0 %v346, 24
        %v737 = vpop.permute.xlu0 %736
        %738 = vrot.lane.b32.xlu0 %v347, 24
        %v739 = vpop.permute.xlu0 %738
        %772 = vrot.lane.b32.xlu0 %v348, 28
        %v773 = vpop.permute.xlu0 %772
        %774 = vrot.lane.b32.xlu0 %v349, 28
        %v775 = vpop.permute.xlu0 %774
        %776 = vrot.lane.b32.xlu0 %v350, 28
        %v777 = vpop.permute.xlu0 %776
        %778 = vrot.lane.b32.xlu0 %v351, 28
        %v779 = vpop.permute.xlu0 %778
        %780 = vrot.lane.b32.xlu0 %v352, 28
        %v781 = vpop.permute.xlu0 %780
        %782 = vrot.lane.b32.xlu0 %v353, 28
        %v783 = vpop.permute.xlu0 %782
        %784 = vrot.lane.b32.xlu0 %v354, 28
        %v785 = vpop.permute.xlu0 %784
        %786 = vrot.lane.b32.xlu0 %v355, 28
        %v787 = vpop.permute.xlu0 %786
        %788 = vrot.lane.b32.xlu0 %v356, 28
        %v789 = vpop.permute.xlu0 %788
        %790 = vrot.lane.b32.xlu0 %v357, 28
        %v791 = vpop.permute.xlu0 %790
        %792 = vrot.lane.b32.xlu0 %v358, 28
        %v793 = vpop.permute.xlu0 %792
        %794 = vrot.lane.b32.xlu0 %v359, 28
        %v795 = vpop.permute.xlu0 %794
        %796 = vrot.lane.b32.xlu0 %v360, 28
        %v797 = vpop.permute.xlu0 %796
        %798 = vrot.lane.b32.xlu0 %v361, 28
        %v799 = vpop.permute.xlu0 %798
        %800 = vrot.lane.b32.xlu0 %v362, 28
        %v801 = vpop.permute.xlu0 %800
        %802 = vrot.lane.b32.xlu0 %v363, 28
        %v803 = vpop.permute.xlu0 %802
        %836 = vrot.lane.b32.xlu0 %v237, 32
        %v837 = vpop.permute.xlu0 %836
        %838 = vrot.lane.b32.xlu0 %v364, 32
        %v839 = vpop.permute.xlu0 %838
        %840 = vrot.lane.b32.xlu0 %v239, 32
        %v841 = vpop.permute.xlu0 %840
        %842 = vrot.lane.b32.xlu0 %v365, 32
        %v843 = vpop.permute.xlu0 %842
        %844 = vrot.lane.b32.xlu0 %v241, 32
        %v845 = vpop.permute.xlu0 %844
        %846 = vrot.lane.b32.xlu0 %v366, 32
        %v847 = vpop.permute.xlu0 %846
        %848 = vrot.lane.b32.xlu0 %v243, 32
        %v849 = vpop.permute.xlu0 %848
        %850 = vrot.lane.b32.xlu0 %v367, 32
        %v851 = vpop.permute.xlu0 %850
        %852 = vrot.lane.b32.xlu0 %v245, 32
        %v853 = vpop.permute.xlu0 %852
        %854 = vrot.lane.b32.xlu0 %v368, 32
        %v855 = vpop.permute.xlu0 %854
        %856 = vrot.lane.b32.xlu0 %v247, 32
        %v857 = vpop.permute.xlu0 %856
        %858 = vrot.lane.b32.xlu0 %v369, 32
        %v859 = vpop.permute.xlu0 %858
        %860 = vrot.lane.b32.xlu0 %v249, 32
        %v861 = vpop.permute.xlu0 %860
        %862 = vrot.lane.b32.xlu0 %v370, 32
        %v863 = vpop.permute.xlu0 %862
        %864 = vrot.lane.b32.xlu0 %v251, 32
        %v865 = vpop.permute.xlu0 %864
        %866 = vrot.lane.b32.xlu0 %v371, 32
        %v867 = vpop.permute.xlu0 %866
        %v884 = vsel %vm219, %v236, %v389
        %v885 = vsel %vm219, %v237, %v391
        %v886 = vsel %vm219, %v238, %v393
        %v887 = vsel %vm219, %v239, %v395
        %v888 = vsel %vm219, %v240, %v397
        %v889 = vsel %vm219, %v241, %v399
        %v890 = vsel %vm219, %v242, %v401
        %v891 = vsel %vm219, %v243, %v403
        %v892 = vsel %vm219, %v244, %v405
        %v893 = vsel %vm219, %v245, %v407
        %v894 = vsel %vm219, %v246, %v409
        %v895 = vsel %vm219, %v247, %v411
        %v896 = vsel %vm219, %v248, %v413
        %v897 = vsel %vm219, %v249, %v415
        %v898 = vsel %vm219, %v250, %v417
        %v899 = vsel %vm219, %v251, %v419
        %vm900 = vcmask 64512
        %v901 = vsel %vm900, %v884, %v453
        %v902 = vsel %vm900, %v885, %v455
        %v903 = vsel %vm900, %v886, %v457
        %v904 = vsel %vm900, %v887, %v459
        %v905 = vsel %vm900, %v888, %v461
        %v906 = vsel %vm900, %v889, %v463
        %v907 = vsel %vm900, %v890, %v465
        %v908 = vsel %vm900, %v891, %v467
        %v909 = vsel %vm900, %v892, %v469
        %v910 = vsel %vm900, %v893, %v471
        %v911 = vsel %vm900, %v894, %v473
        %v912 = vsel %vm900, %v895, %v475
        %v913 = vsel %vm900, %v896, %v477
        %v914 = vsel %vm900, %v897, %v479
        %v915 = vsel %vm900, %v898, %v481
        %v916 = vsel %vm900, %v899, %v483
        %vm917 = vcmask 97280
        %v918 = vsel %vm917, %v901, %v517
        %v919 = vsel %vm917, %v902, %v519
        %v920 = vsel %vm917, %v903, %v521
        %v921 = vsel %vm917, %v904, %v523
        %v922 = vsel %vm917, %v905, %v525
        %v923 = vsel %vm917, %v906, %v527
        %v924 = vsel %vm917, %v907, %v529
        %v925 = vsel %vm917, %v908, %v531
        %v926 = vsel %vm917, %v909, %v533
        %v927 = vsel %vm917, %v910, %v535
        %v928 = vsel %vm917, %v911, %v537
        %v929 = vsel %vm917, %v912, %v539
        %v930 = vsel %vm917, %v913, %v541
        %v931 = vsel %vm917, %v914, %v543
        %v932 = vsel %vm917, %v915, %v545
        %v933 = vsel %vm917, %v916, %v547
        %vm934 = vcmask 130048
        %v935 = vsel %vm934, %v918, %v581
        %v936 = vsel %vm934, %v919, %v583
        %v937 = vsel %vm934, %v920, %v585
        %v938 = vsel %vm934, %v921, %v587
        %v939 = vsel %vm934, %v922, %v589
        %v940 = vsel %vm934, %v923, %v591
        %v941 = vsel %vm934, %v924, %v593
        %v942 = vsel %vm934, %v925, %v595
        %v943 = vsel %vm934, %v926, %v597
        %v944 = vsel %vm934, %v927, %v599
        %v945 = vsel %vm934, %v928, %v601
        %v946 = vsel %vm934, %v929, %v603
        %v947 = vsel %vm934, %v930, %v605
        %v948 = vsel %vm934, %v931, %v607
        %v949 = vsel %vm934, %v932, %v609
        %v950 = vsel %vm934, %v933, %v611
        %vm951 = vcmask 162816
        %v952 = vsel %vm951, %v935, %v645
        %v953 = vsel %vm951, %v936, %v647
        %v954 = vsel %vm951, %v937, %v649
        %v955 = vsel %vm951, %v938, %v651
        %v956 = vsel %vm951, %v939, %v653
        %v957 = vsel %vm951, %v940, %v655
        %v958 = vsel %vm951, %v941, %v657
        %v959 = vsel %vm951, %v942, %v659
        %v960 = vsel %vm951, %v943, %v661
        %v961 = vsel %vm951, %v944, %v663
        %v962 = vsel %vm951, %v945, %v665
        %v963 = vsel %vm951, %v946, %v667
        %v964 = vsel %vm951, %v947, %v669
        %v965 = vsel %vm951, %v948, %v671
        %v966 = vsel %vm951, %v949, %v673
        %v967 = vsel %vm951, %v950, %v675
        %vm968 = vcmask 195584
        %v969 = vsel %vm968, %v952, %v709
        %v970 = vsel %vm968, %v953, %v711
        %v971 = vsel %vm968, %v954, %v713
        %v972 = vsel %vm968, %v955, %v715
        %v973 = vsel %vm968, %v956, %v717
        %v974 = vsel %vm968, %v957, %v719
        %v975 = vsel %vm968, %v958, %v721
        %v976 = vsel %vm968, %v959, %v723
        %v977 = vsel %vm968, %v960, %v725
        %v978 = vsel %vm968, %v961, %v727
        %v979 = vsel %vm968, %v962, %v729
        %v980 = vsel %vm968, %v963, %v731
        %v981 = vsel %vm968, %v964, %v733
        %v982 = vsel %vm968, %v965, %v735
        %v983 = vsel %vm968, %v966, %v737
        %v984 = vsel %vm968, %v967, %v739
        %vm985 = vcmask 228352
        %v986 = vsel %vm985, %v969, %v773
        %v987 = vsel %vm985, %v970, %v775
        %v988 = vsel %vm985, %v971, %v777
        %v989 = vsel %vm985, %v972, %v779
        %v990 = vsel %vm985, %v973, %v781
        %v991 = vsel %vm985, %v974, %v783
        %v992 = vsel %vm985, %v975, %v785
        %v993 = vsel %vm985, %v976, %v787
        %v994 = vsel %vm985, %v977, %v789
        %v995 = vsel %vm985, %v978, %v791
        %v996 = vsel %vm985, %v979, %v793
        %v997 = vsel %vm985, %v980, %v795
        %v998 = vsel %vm985, %v981, %v797
        %v999 = vsel %vm985, %v982, %v799
        %v1000 = vsel %vm985, %v983, %v801
        %v1001 = vsel %vm985, %v984, %v803
        %vm1002 = vcmask 261120
        %v1003 = vsel %vm1002, %v986, %v837
        %v1004 = vsel %vm1002, %v987, %v839
        %v1005 = vsel %vm1002, %v988, %v841
        %v1006 = vsel %vm1002, %v989, %v843
        %v1007 = vsel %vm1002, %v990, %v845
        %v1008 = vsel %vm1002, %v991, %v847
        %v1009 = vsel %vm1002, %v992, %v849
        %v1010 = vsel %vm1002, %v993, %v851
        %v1011 = vsel %vm1002, %v994, %v853
        %v1012 = vsel %vm1002, %v995, %v855
        %v1013 = vsel %vm1002, %v996, %v857
        %v1014 = vsel %vm1002, %v997, %v859
        %v1015 = vsel %vm1002, %v998, %v861
        %v1016 = vsel %vm1002, %v999, %v863
        %v1017 = vsel %vm1002, %v1000, %v865
        %v1018 = vsel %vm1002, %v1001, %v867
        %v1019 = vld [vmem:[%s1] sm:$0xff]
        %v1020 = vld [vmem:[%s1 + $0x8] sm:$0xff]
        %v1021 = vld [vmem:[%s1 + $0x10] sm:$0xff]
        %v1022 = vld [vmem:[%s1 + $0x18] sm:$0xff]
        %v1023 = vld [vmem:[%s1 + $0x20] sm:$0xf]
        %vm1024 = vcmask 293888
        %v1026 = vsel %vm1024, %v1003, 0
        %v1029 = vsel %vm1024, %v1004, 0
        %v1032 = vsel %vm1024, %v1005, 0
        %v1035 = vsel %vm1024, %v1006, 0
        %v1038 = vsel %vm1024, %v1007, 0
        %v1041 = vsel %vm1024, %v1008, 0
        %v1044 = vsel %vm1024, %v1009, 0
        %v1047 = vsel %vm1024, %v1010, 0
        %v1050 = vsel %vm1024, %v1011, 0
        %v1053 = vsel %vm1024, %v1012, 0
        %v1056 = vsel %vm1024, %v1013, 0
        %v1059 = vsel %vm1024, %v1014, 0
        %v1062 = vsel %vm1024, %v1015, 0
        %v1065 = vsel %vm1024, %v1016, 0
        %v1068 = vsel %vm1024, %v1017, 0
        %v1071 = vsel %vm1024, %v1018, 0
        %vm1073 = vcmask 1043456
        %v1075 = vsel %vm1073, %v1023, 0
        %1077 = vmatprep.subr.mxu0 0.0
        %1078 = vmatpush1.msra.mxu0 %v1019
        %1079 = vmatprep.subr.mxu0 0.0
        %1080 = vmatpush1.msra.mxu0 %v1020
        %1081 = vmatprep.subr.mxu0 0.0
        %1082 = vmatpush1.msra.mxu0 %v1021
        %1083 = vmatprep.subr.mxu0 0.0
        %1084 = vmatpush1.msra.mxu0 %v1022
        %1085 = vmatprep.subr.mxu0 0.0
        %1086 = vmatpush1.msra.mxu0 %v1075
        %1087 = vmatprep.subr.mxu0 0.0
        %1088 = vmatpush1.msra.mxu0 0.0
        %1089 = vmatprep.subr.mxu0 0.0
        %1090 = vmatpush1.msra.mxu0 0.0
        %1091 = vmatprep.subr.mxu0 0.0
        %1092 = vmatpush1.msra.mxu0 0.0
        %1093 = vmatprep.subr.mxu0 0.0
        %1094 = vmatpush1.msra.mxu0 0.0
        %1095 = vmatprep.subr.mxu0 0.0
        %1096 = vmatpush1.msra.mxu0 0.0
        %1097 = vmatprep.subr.mxu0 0.0
        %1098 = vmatpush1.msra.mxu0 0.0
        %1099 = vmatprep.subr.mxu0 0.0
        %1100 = vmatpush1.msra.mxu0 0.0
        %1101 = vmatprep.subr.mxu0 0.0
        %1102 = vmatpush1.msra.mxu0 0.0
        %1103 = vmatprep.subr.mxu0 0.0
        %1104 = vmatpush1.msra.mxu0 0.0
        %1105 = vmatprep.subr.mxu0 0.0
        %1106 = vmatpush1.msra.mxu0 0.0
        %1107 = vmatprep.subr.mxu0 0.0
        %1108 = vmatpush1.msra.mxu0 0.0
        %1109 = vmatprep.subr.mxu0 0.0
        %1110 = vmatpush1.msra.mxu0 0.0
        %1111 = vmatprep.subr.mxu0 0.0
        %1112 = vmatpush1.msra.mxu0 0.0
        %1113 = vmatprep.subr.mxu0 0.0
        %1114 = vmatpush1.msra.mxu0 0.0
        %1115 = vmatprep.subr.mxu0 0.0
        %1116 = vmatpush1.msra.mxu0 0.0
        %1117 = vmatprep.subr.mxu0 0.0
        %1118 = vmatpush1.msra.mxu0 0.0
        %1119 = vmatprep.subr.mxu0 0.0
        %1120 = vmatpush1.msra.mxu0 0.0
        %1121 = vmatprep.subr.mxu0 0.0
        %1122 = vmatpush1.msra.mxu0 0.0
        %1123 = vmatprep.subr.mxu0 0.0
        %1124 = vmatpush1.msra.mxu0 0.0
        %1125 = vmatprep.subr.mxu0 0.0
        %1126 = vmatpush1.msra.mxu0 0.0
        %1127 = vmatprep.subr.mxu0 0.0
        %1128 = vmatpush1.msra.mxu0 0.0
        %1129 = vmatprep.subr.mxu0 0.0
        %1130 = vmatpush1.msra.mxu0 0.0
        %1131 = vmatprep.subr.mxu0 0.0
        %1132 = vmatpush1.msra.mxu0 0.0
        %1133 = vmatprep.subr.mxu0 0.0
        %1134 = vmatpush1.msra.mxu0 0.0
        %1135 = vmatprep.subr.mxu0 0.0
        %1136 = vmatpush1.msra.mxu0 0.0
        %1137 = vmatprep.subr.mxu0 0.0
        %1138 = vmatpush1.msra.mxu0 0.0
        %1139 = vmatprep.subr.mxu0 0.0
        %1140 = vmatpush1.msra.mxu0 0.0
        %1141 = vmatprep.mubr.f32.mxu0 0.0
        %1142 = vmatmul.mubr.f32.gmra.mrb[0].mxu0 %v1026
        %v1143 = vpop.f32.mrb[0].mxu0
        %v1144 = vadd.f32 0.0, %v1143
        %v1145 = vpop.f32.mrb[0].mxu0
        %1146 = vmatprep.mubr.f32.mxu0 0.0
        %1147 = vmatmul.mubr.f32.gmra.mrb[0].mxu0 %v1029
        %v1148 = vpop.f32.mrb[0].mxu0
        %v1149 = vadd.f32 0.0, %v1148
        %v1150 = vpop.f32.mrb[0].mxu0
        %1151 = vmatprep.mubr.f32.mxu0 0.0
        %1152 = vmatmul.mubr.f32.gmra.mrb[0].mxu0 %v1032
        %v1153 = vpop.f32.mrb[0].mxu0
        %v1154 = vadd.f32 0.0, %v1153
        %v1155 = vpop.f32.mrb[0].mxu0
        %1156 = vmatprep.mubr.f32.mxu0 0.0
        %1157 = vmatmul.mubr.f32.gmra.mrb[0].mxu0 %v1035
        %v1158 = vpop.f32.mrb[0].mxu0
        %v1159 = vadd.f32 0.0, %v1158
        %v1160 = vpop.f32.mrb[0].mxu0
        %1161 = vmatprep.mubr.f32.mxu0 0.0
        %1162 = vmatmul.mubr.f32.gmra.mrb[0].mxu0 %v1038
        %v1163 = vpop.f32.mrb[0].mxu0
        %v1164 = vadd.f32 0.0, %v1163
        %v1165 = vpop.f32.mrb[0].mxu0
        %1166 = vmatprep.mubr.f32.mxu0 0.0
        %1167 = vmatmul.mubr.f32.gmra.mrb[0].mxu0 %v1041
        %v1168 = vpop.f32.mrb[0].mxu0
        %v1169 = vadd.f32 0.0, %v1168
        %v1170 = vpop.f32.mrb[0].mxu0
        %1171 = vmatprep.mubr.f32.mxu0 0.0
        %1172 = vmatmul.mubr.f32.gmra.mrb[0].mxu0 %v1044
        %v1173 = vpop.f32.mrb[0].mxu0
        %v1174 = vadd.f32 0.0, %v1173
        %v1175 = vpop.f32.mrb[0].mxu0
        %1176 = vmatprep.mubr.f32.mxu0 0.0
        %1177 = vmatmul.mubr.f32.gmra.mrb[0].mxu0 %v1047
        %v1178 = vpop.f32.mrb[0].mxu0
        %v1179 = vadd.f32 0.0, %v1178
        %v1180 = vpop.f32.mrb[0].mxu0
        %1181 = vmatprep.mubr.f32.mxu0 0.0
        %1182 = vmatmul.mubr.f32.gmra.mrb[0].mxu0 %v1050
        %v1183 = vpop.f32.mrb[0].mxu0
        %v1184 = vadd.f32 0.0, %v1183
        %v1185 = vpop.f32.mrb[0].mxu0
        %1186 = vmatprep.mubr.f32.mxu0 0.0
        %1187 = vmatmul.mubr.f32.gmra.mrb[0].mxu0 %v1053
        %v1188 = vpop.f32.mrb[0].mxu0
        %v1189 = vadd.f32 0.0, %v1188
        %v1190 = vpop.f32.mrb[0].mxu0
        %1191 = vmatprep.mubr.f32.mxu0 0.0
        %1192 = vmatmul.mubr.f32.gmra.mrb[0].mxu0 %v1056
        %v1193 = vpop.f32.mrb[0].mxu0
        %v1194 = vadd.f32 0.0, %v1193
        %v1195 = vpop.f32.mrb[0].mxu0
        %1196 = vmatprep.mubr.f32.mxu0 0.0
        %1197 = vmatmul.mubr.f32.gmra.mrb[0].mxu0 %v1059
        %v1198 = vpop.f32.mrb[0].mxu0
        %v1199 = vadd.f32 0.0, %v1198
        %v1200 = vpop.f32.mrb[0].mxu0
        %1201 = vmatprep.mubr.f32.mxu0 0.0
        %1202 = vmatmul.mubr.f32.gmra.mrb[0].mxu0 %v1062
        %v1203 = vpop.f32.mrb[0].mxu0
        %v1204 = vadd.f32 0.0, %v1203
        %v1205 = vpop.f32.mrb[0].mxu0
        %1206 = vmatprep.mubr.f32.mxu0 0.0
        %1207 = vmatmul.mubr.f32.gmra.mrb[0].mxu0 %v1065
        %v1208 = vpop.f32.mrb[0].mxu0
        %v1209 = vadd.f32 0.0, %v1208
        %v1210 = vpop.f32.mrb[0].mxu0
        %1211 = vmatprep.mubr.f32.mxu0 0.0
        %1212 = vmatmul.mubr.f32.gmra.mrb[0].mxu0 %v1068
        %v1213 = vpop.f32.mrb[0].mxu0
        %v1214 = vadd.f32 0.0, %v1213
        %v1215 = vpop.f32.mrb[0].mxu0
        %1216 = vmatprep.mubr.f32.mxu0 0.0
        %1217 = vmatmul.mubr.f32.gmra.mrb[0].mxu0 %v1071
        %v1218 = vpop.f32.mrb[0].mxu0
        %v1219 = vadd.f32 0.0, %v1218
        %v1220 = vpop.f32.mrb[0].mxu0
        %1221 = vdwg.mxu0
        %1222 = vst [vmem:[%s170] sm:$0xff] %v1144
        %1223 = vst [vmem:[%s170 + $0x8] sm:$0xff] %v1149
        %1224 = vst [vmem:[%s170 + $0x10] sm:$0xff] %v1154
        %1225 = vst [vmem:[%s170 + $0x18] sm:$0xff] %v1159
        %1226 = vst [vmem:[%s170 + $0x20] sm:$0xff] %v1164
        %1227 = vst [vmem:[%s170 + $0x28] sm:$0xff] %v1169
        %1228 = vst [vmem:[%s170 + $0x30] sm:$0xff] %v1174
        %1229 = vst [vmem:[%s170 + $0x38] sm:$0xff] %v1179
        %1230 = vst [vmem:[%s170 + $0x40] sm:$0xff] %v1184
        %1231 = vst [vmem:[%s170 + $0x48] sm:$0xff] %v1189
        %1232 = vst [vmem:[%s170 + $0x50] sm:$0xff] %v1194
        %1233 = vst [vmem:[%s170 + $0x58] sm:$0xff] %v1199
        %1234 = vst [vmem:[%s170 + $0x60] sm:$0xff] %v1204
        %1235 = vst [vmem:[%s170 + $0x68] sm:$0xff] %v1209
        %1236 = vst [vmem:[%s170 + $0x70] sm:$0xff] %v1214
        %1237 = vst [vmem:[%s170 + $0x78] sm:$0xff] %v1219
        %v1238 = vadd.f32 %v1144, %v1149
        %v1239 = vadd.f32 %v1238, %v1154
        %v1240 = vadd.f32 %v1239, %v1159
        %v1241 = vadd.f32 %v1240, %v1164
        %v1242 = vadd.f32 %v1241, %v1169
        %v1243 = vadd.f32 %v1242, %v1174
        %v1244 = vadd.f32 %v1243, %v1179
        %v1245 = vadd.f32 %v1244, %v1184
        %v1246 = vadd.f32 %v1245, %v1189
        %v1247 = vadd.f32 %v1246, %v1194
        %v1248 = vadd.f32 %v1247, %v1199
        %v1249 = vadd.f32 %v1248, %v1204
        %v1250 = vadd.f32 %v1249, %v1209
        %v1251 = vadd.f32 %v1250, %v1214
        %v1252 = vadd.f32 %v1251, %v1219
        %v1253 = vrot.slane %v1252, 4
        %v1254 = vadd.f32 %v1252, %v1253
        %v1255 = vrot.slane %v1254, 2
        %v1256 = vadd.f32 %v1254, %v1255
        %v1257 = vrot.slane %v1256, 1
        %v1258 = vadd.f32 %v1256, %v1257
        %v1259 = vmul.f32 %v1144, %v1144
        %v1260 = vmul.f32 %v1149, %v1149
        %v1261 = vmul.f32 %v1154, %v1154
        %v1262 = vmul.f32 %v1159, %v1159
        %v1263 = vmul.f32 %v1164, %v1164
        %v1264 = vmul.f32 %v1169, %v1169
        %v1265 = vmul.f32 %v1174, %v1174
        %v1266 = vmul.f32 %v1179, %v1179
        %v1267 = vmul.f32 %v1184, %v1184
        %v1268 = vmul.f32 %v1189, %v1189
        %v1269 = vmul.f32 %v1194, %v1194
        %v1270 = vmul.f32 %v1199, %v1199
        %v1271 = vmul.f32 %v1204, %v1204
        %v1272 = vmul.f32 %v1209, %v1209
        %v1273 = vmul.f32 %v1214, %v1214
        %v1274 = vmul.f32 %v1219, %v1219
        %v1275 = vadd.f32 %v1259, %v1260
        %v1276 = vadd.f32 %v1275, %v1261
        %v1277 = vadd.f32 %v1276, %v1262
        %v1278 = vadd.f32 %v1277, %v1263
        %v1279 = vadd.f32 %v1278, %v1264
        %v1280 = vadd.f32 %v1279, %v1265
        %v1281 = vadd.f32 %v1280, %v1266
        %v1282 = vadd.f32 %v1281, %v1267
        %v1283 = vadd.f32 %v1282, %v1268
        %v1284 = vadd.f32 %v1283, %v1269
        %v1285 = vadd.f32 %v1284, %v1270
        %v1286 = vadd.f32 %v1285, %v1271
        %v1287 = vadd.f32 %v1286, %v1272
        %v1288 = vadd.f32 %v1287, %v1273
        %v1289 = vadd.f32 %v1288, %v1274
        %v1290 = vrot.slane %v1289, 4
        %v1291 = vadd.f32 %v1289, %v1290
        %v1292 = vrot.slane %v1291, 2
        %v1293 = vadd.f32 %v1291, %v1292
        %v1294 = vrot.slane %v1293, 1
        %v1295 = vadd.f32 %v1293, %v1294
        %vm1296 = vcmask 1040384
        %v1297 = vsel %vm1296, %v1258, %v1295
        %1298 = vst [vmem:[%s177] sm:$0x3] %v1297
        %s1299 = sand.u32 %s76, 1
        %s1300 = scalar_lea.sflag [#allocation4], %s1299
        %s1301 = sand.u32 %s76, 1
        %s1302 = smul.addr %s1301, 128
        %s1303 = scalar_lea.vmem [#allocation3], %s1302
        %s1304 = sand.u32 %s102, 1
        %s1305 = scalar_lea.sflag [#allocation6], %s1304
        %s1306 = sand.u32 %s102, 1
        %s1307 = smul.addr %s1306, 2
        %s1308 = scalar_lea.vmem [#allocation5], %s1307
        // Predicated region
        $region29: #{tpu_custom_call.1} parent=27 // pred_check
          %p1309 = pneg %p86
        $region30: #{tpu_custom_call.1} parent=27 // pred_check_branch
          %1311 = sbr.rel (%p1309) target = $region32
        $region31: #{tpu_custom_call.1} parent=27 // pred_region
          %s1312 = smul.u32 8, %s21
          %s1314 = ssub.s32 2048, 2048
          %1315 = vsyncadd %s1300, %s1314
          %s1316 = smul.addr %s1312, 2
          %s1317 = smul.addr %s1316, 128
          %s1318 = scalar_lea.hbm %s2, %s1317
          %s1319 = sshll.u32 %s1303, 4
          %s1320 = int_to_ptr.vmem [resolvable:$true] %s1319
          %1325 = dma.vmem_to_hbm [thread:$0]  %s1320, 2048, %s1318, %s1300, 128, 128, 8
        $region32: #{tpu_custom_call.1} parent=27 // pred_fallthru
          _
        // Predicated region
        $region33: #{tpu_custom_call.1} parent=27 // pred_check
          %p1326 = pneg %p112
        $region34: #{tpu_custom_call.1} parent=27 // pred_check_branch
          %1328 = sbr.rel (%p1326) target = $region36
        $region35: #{tpu_custom_call.1} parent=27 // pred_region
          %s1330 = ssub.s32 32, 32
          %1331 = vsyncadd %s1305, %s1330
          %s1332 = smul.addr %s21, 32
          %s1333 = scalar_lea.hbm %s3, %s1332
          %s1335 = sshll.u32 %s1308, 4
          %s1336 = int_to_ptr.vmem [resolvable:$true] %s1335
          %1338 = dma.vmem_to_hbm [thread:$0]  %s1336, 32, %s1333, %s1305
        $region36: #{tpu_custom_call.1} parent=27 // pred_fallthru
          _
      $region28: #{tpu_custom_call.1} parent=5 // pred_fallthru
        _
      %p1339 = scmp.le.s32.totalorder 2, %s16
      // Predicated region
      $region37: #{tpu_custom_call.1} parent=5 // pred_check
        %p1340 = pneg %p1339
      $region38: #{tpu_custom_call.1} parent=5 // pred_check_branch
        %1342 = sbr.rel (%p1340) target = $region40
      $region39: #{tpu_custom_call.1} parent=5 // pred_region
        %s1343 = ssub.s32 %s16, 2
        // Predicated region
        $region41: #{tpu_custom_call.1} parent=39 // pred_check
          %p1344 = pneg %p92
        $region42: #{tpu_custom_call.1} parent=39 // pred_check_branch
          %1346 = sbr.rel (%p1344) target = $region44
        $region43: #{tpu_custom_call.1} parent=39 // pred_region
          %s1347 = sand.u32 %s77, 1
          %s1348 = scalar_lea.sflag [#allocation4], %s1347
          %s1349 = sand.u32 %s77, 1
          %s1350 = smul.addr %s1349, 128
          %s1351 = scalar_lea.vmem [#allocation3], %s1350
          %1352 = dma.done %s1348, 2048
        $region44: #{tpu_custom_call.1} parent=39 // pred_fallthru
          _
        // Predicated region
        $region45: #{tpu_custom_call.1} parent=39 // pred_check
          %p1353 = pneg %p118
        $region46: #{tpu_custom_call.1} parent=39 // pred_check_branch
          %1355 = sbr.rel (%p1353) target = $region48
        $region47: #{tpu_custom_call.1} parent=39 // pred_region
          %s1356 = sand.u32 %s103, 1
          %s1357 = scalar_lea.sflag [#allocation6], %s1356
          %s1358 = sand.u32 %s103, 1
          %s1359 = smul.addr %s1358, 2
          %s1360 = scalar_lea.vmem [#allocation5], %s1359
          %1361 = dma.done %s1357, 32
        $region48: #{tpu_custom_call.1} parent=39 // pred_fallthru
          _
      $region40: #{tpu_custom_call.1} parent=5 // pred_fallthru
        _
    $region6: #{tpu_custom_call.1} parent=1 // loop_footer
      %s20 = sadd.s32 1, %s16
    $region7: #{tpu_custom_call.1} parent=1 // loop_footer_branch
      %15 = sbr.rel target = $region3
    $region8: #{tpu_custom_call.1} parent=1 // loop_exit
      _
    %1362 = vsyncpa [#allocation4], 1
    %s1363 = scalar_lea.sflag [#allocation4], 1
    %1364 = vsyncpa %s1363, 1
    %1365 = vsyncpa [#allocation6], 1
    %s1366 = scalar_lea.sflag [#allocation6], 1
    %1367 = vsyncpa %s1366, 1

</llo_original>
